<compile_context>
chip_gen: v6e
topology: v6e:2x2x1
jax: 0.10.0
libtpu: 0.0.40
codegen_flags: <defaults>
</compile_context>

<pallas_src>
import functools

import jax
import jax.numpy as jnp
from jax import lax
from jax.experimental import pallas as pl
from jax.experimental.pallas import tpu as pltpu

BF16 = jnp.bfloat16
F32 = jnp.float32


def _round_up(x, m):
    return (x + m - 1) // m * m


def _const_spec(shape):
    return pl.BlockSpec(shape, lambda *_: (0,) * len(shape))


def _tpu_generation_params():
    """Generation-aware tile caps, VMEM budget and exp dtype."""
    kind = ""
    try:
        kind = jax.devices()[0].device_kind.lower()
    except Exception:
        pass
    vmem_bytes = None
    try:
        vmem_bytes = int(pltpu.get_tpu_info().vmem_capacity_bytes)
    except Exception:
        vmem_bytes = None
    if vmem_bytes is None:
        vmem_bytes = 64 * 1024 * 1024                       # conservative (v7x-sized)
    big_vmem = vmem_bytes >= 100 * 1024 * 1024              # v5e/v6e: 128 MiB, v7x: 64 MiB
    is_v5e = ("v5 lite" in kind) or ("v5e" in kind) or ("v5litepod" in kind)
    return {
        "tj_max": 1024 if big_vmem else 512,
        "ti_max": 512 if big_vmem else 256,
        "vmem_limit": int(min(vmem_bytes * 3 // 4, 100 * 1024 * 1024)),
        # bf16 exponentials on v6e/v7x (bf16 EUP); keep f32 exp on v5e.
        "exp_dtype": F32 if is_v5e else BF16,
    }


# ---------------------------------------------------------------------------
# Kernel 1: the three 1x1 convolutions + ReLU (DAM.conv1, PAB.conv1, PAB.conv2)
# Grid over spatial column blocks ("parallel"); a 1x1 conv is column
# independent.  Padded spatial columns (S_pad > S) are zeroed on the way out.
# ---------------------------------------------------------------------------
def _proj_kernel(x_ref, w1_ref, b1_ref, wp1_ref, bp1_ref, wp2_ref, bp2_ref,
                 x1_ref, p1_ref, p2_ref, *, s_valid, need_mask):
    x_bf = x_ref[...].astype(BF16)                                     # (C, TJ)
    x1 = jnp.maximum(
        jnp.dot(w1_ref[...], x_bf, preferred_element_type=F32) + b1_ref[...],
        0.0)                                                           # f32
    x1_in = x1.astype(BF16)
    p1 = jnp.maximum(
        jnp.dot(wp1_ref[...], x1_in, preferred_element_type=F32) + bp1_ref[...],
        0.0)
    p2 = jnp.maximum(
        jnp.dot(wp2_ref[...], x1_in, preferred_element_type=F32) + bp2_ref[...],
        0.0)
    if need_mask:
        ts = x1.shape[-1]
        col = pl.program_id(0) * ts + lax.broadcasted_iota(jnp.int32, (1, ts), 1)
        valid = col < s_valid
        x1 = jnp.where(valid, x1, 0.0)
        p1 = jnp.where(valid, p1, 0.0)
        p2 = jnp.where(valid, p2, 0.0)
    x1_ref[...] = x1.astype(BF16)          # activations stored bf16 (HBM traffic)
    p1_ref[...] = p1.astype(BF16)
    p2_ref[...] = p2.astype(BF16)


# ---------------------------------------------------------------------------
# Kernel 2: CAB channel-attention matrix att_c = softmax_rows(x1 x1^T), (C, C).
# Grid: (row blocks "parallel", spatial blocks "arbitrary" reduction).
# Padded spatial columns of x1 are already zero, so they don't perturb the sum.
# ---------------------------------------------------------------------------
def _cab_att_kernel(x1r_ref, x1f_ref, att_ref, acc_ref):
    k = pl.program_id(1)

    @pl.when(k == 0)
    def _():
        acc_ref[...] = jnp.zeros_like(acc_ref)

    # aff_c[r_blk, :] += x1[r_blk, s_blk] @ x1[:, s_blk]^T (contract spatial axis).
    acc_ref[...] += lax.dot_general(x1r_ref[...], x1f_ref[...],
                                    (((1,), (1,)), ((), ())),
                                    preferred_element_type=F32)

    @pl.when(k == pl.num_programs(1) - 1)
    def _():
        aff = acc_ref[...]
        aff = aff - jnp.max(aff, axis=-1, keepdims=True)
        e = jnp.exp(aff)
        inv = pl.reciprocal(jnp.sum(e, axis=-1, keepdims=True), approx=True)
        att_ref[...] = (e * inv).astype(att_ref.dtype)


# ---------------------------------------------------------------------------
# Kernel 3: PAB row stats.  A = p2^T p2 is (S, S) and is never materialized;
# for each row block i we stream column blocks j (online max / sum-exp) and
# emit c_i = logsumexp_j A[i, j], so softmax(A)[i, j] = exp(A[i, j] - c_i).
# Padded key columns are masked to -inf so they don't inflate row sums.
# Grid: (row blocks "parallel", column blocks "arbitrary").
# ---------------------------------------------------------------------------
def _pab_stats_kernel(p2i_ref, p2j_ref, c_ref, m_ref, l_ref, *,
                      s_valid, tj, need_mask, exp_dtype):
    j = pl.program_id(1)

    @pl.when(j == 0)
    def _():
        m_ref[...] = jnp.full_like(m_ref, -jnp.inf)
        l_ref[...] = jnp.zeros_like(l_ref)

    # A[i_blk, j_blk] = p2[:, i_blk]^T @ p2[:, j_blk] (contract channel axis).
    a = lax.dot_general(p2i_ref[...], p2j_ref[...], (((0,), (0,)), ((), ())),
                        preferred_element_type=F32)                    # (TI, TJ)
    if need_mask:
        col = j * tj + lax.broadcasted_iota(jnp.int32, (1, tj), 1)
        a = jnp.where(col < s_valid, a, -jnp.inf)

    m_prev = m_ref[...]
    m_new = jnp.maximum(m_prev, jnp.max(a, axis=-1, keepdims=True))
    e = jnp.exp((a - m_new).astype(exp_dtype)).astype(F32)
    l_ref[...] = l_ref[...] * jnp.exp(m_prev - m_new) + jnp.sum(e, axis=-1,
                                                                keepdims=True)
    m_ref[...] = m_new

    @pl.when(j == pl.num_programs(1) - 1)
    def _():
        c_ref[...] = m_ref[...] + jnp.log(l_ref[...])   # (TI, 1) f32


# ---------------------------------------------------------------------------
# Kernel 4: output column blocks.
#   out[:, j] = att_c @ x1[:, j] + 2*x1[:, j]
#             + sum_i p1[:, i_blk] @ exp(A[i_blk, j_blk] - c[i_blk])
# Grid: (output column blocks "parallel", i blocks "arbitrary" reduction).
# The (TI, TJ) tile of A is recomputed from p2 (cheap: K = C//8).  Padded i
# columns have p1 == 0 so they contribute nothing.
# ---------------------------------------------------------------------------
def _combine_kernel(att_ref, x1j_ref, p1i_ref, p2i_ref, p2j_ref, c_ref,
                    o_ref, acc_ref, *, exp_dtype):
    i = pl.program_id(1)

    @pl.when(i == 0)
    def _():
        x1j = x1j_ref[...]                                             # (C, TJ) bf16
        cab = jnp.dot(att_ref[...], x1j, preferred_element_type=F32)
        acc_ref[...] = cab + 2.0 * x1j.astype(F32)

    a = lax.dot_general(p2i_ref[...], p2j_ref[...], (((0,), (0,)), ((), ())),
                        preferred_element_type=F32)                    # (TI, TJ)
    p = jnp.exp((a - c_ref[...]).astype(exp_dtype)).astype(BF16)
    acc_ref[...] += jnp.dot(p1i_ref[...], p, preferred_element_type=F32)

    @pl.when(i == pl.num_programs(1) - 1)
    def _():
        o_ref[...] = acc_ref[...]


def dam_forward(x_nchw, w1, b1, wp1, bp1, wp2, bp2, *, ti=None, tj=None, tr=None):
    """DAM forward.  x_nchw: (1, C, d2, d3) f32; 1x1-conv weights squeezed to
    (C_out, C_in) with biases (C_out, 1)."""
    n, C, d2, d3 = x_nchw.shape
    assert n == 1, "DAM's reshape(C, H*W) implies batch size 1"
    S = d2 * d3
    C8 = wp2.shape[0]

    gen = _tpu_generation_params()
    if tj is None:                          # output / normalization-sweep block
        tj = min(gen["tj_max"], _round_up(S, 128))
    if ti is None:                          # A-row / reduction block
        ti = min(gen["ti_max"], tj)
        while tj % ti:
            ti -= 128
    assert tj % 128 == 0 and ti % 128 == 0 and tj % ti == 0
    if tr is None:                          # CAB affinity row block
        tr = C
        for cand in (256, 128, 64, 32, 16, 8):
            if C % cand == 0:
                tr = cand
                break
    assert C % tr == 0

    S_pad = _round_up(S, tj)
    need_mask = S_pad != S
    nsj, nsi = S_pad // tj, S_pad // ti
    vmem_limit = gen["vmem_limit"]
    exp_dtype = gen["exp_dtype"]

    x2d = x_nchw.reshape(C, S).astype(F32)
    if need_mask:
        x2d = jnp.pad(x2d, ((0, 0), (0, S_pad - S)))
    w1b, wp1b, wp2b = (w.astype(BF16) for w in (w1, wp1, wp2))
    b1f, bp1f, bp2f = (b.astype(F32) for b in (b1, bp1, bp2))

    # ---- kernel 1: projections ------------------------------------------
    x1, p1, p2 = pl.pallas_call(
        functools.partial(_proj_kernel, s_valid=S, need_mask=need_mask),
        out_shape=(jax.ShapeDtypeStruct((C, S_pad), BF16),
                   jax.ShapeDtypeStruct((C, S_pad), BF16),
                   jax.ShapeDtypeStruct((C8, S_pad), BF16)),
        grid=(nsj,),
        in_specs=[
            pl.BlockSpec((C, tj), lambda k: (0, k)),
            _const_spec((C, C)), _const_spec((C, 1)),
            _const_spec((C, C)), _const_spec((C, 1)),
            _const_spec((C8, C)), _const_spec((C8, 1)),
        ],
        out_specs=(
            pl.BlockSpec((C, tj), lambda k: (0, k)),
            pl.BlockSpec((C, tj), lambda k: (0, k)),
            pl.BlockSpec((C8, tj), lambda k: (0, k)),
        ),
        compiler_params=pltpu.CompilerParams(
            dimension_semantics=("parallel",), vmem_limit_bytes=vmem_limit),
        cost_estimate=pl.CostEstimate(
            flops=int(4 * C * C * S_pad + 2 * C8 * C * S_pad),
            transcendentals=0,
            bytes_accessed=int(4 * C * S_pad + 2 * (2 * C + C8) * S_pad
                               + 2 * (2 * C * C + C8 * C) + 4 * (2 * C + C8))),
    )(x2d, w1b, b1f, wp1b, bp1f, wp2b, bp2f)

    # ---- kernel 2: CAB channel-attention matrix (row-split) ---------------
    att_c = pl.pallas_call(
        _cab_att_kernel,
        out_shape=jax.ShapeDtypeStruct((C, C), BF16),
        grid=(C // tr, nsj),
        in_specs=[
            pl.BlockSpec((tr, tj), lambda r, k: (r, k)),
            pl.BlockSpec((C, tj), lambda r, k: (0, k)),
        ],
        out_specs=pl.BlockSpec((tr, C), lambda r, k: (r, 0)),
        scratch_shapes=[pltpu.VMEM((tr, C), F32)],
        compiler_params=pltpu.CompilerParams(
            dimension_semantics=("parallel", "arbitrary"),
            vmem_limit_bytes=vmem_limit),
        cost_estimate=pl.CostEstimate(
            flops=int(2 * C * C * S_pad + 5 * C * C),
            transcendentals=int(C * C),
            bytes_accessed=int(2 * C * S_pad * (C // tr + 1) + 2 * C * C)),
    )(x1, x1)

    # ---- kernel 3: PAB per-row logsumexp stats of A = p2^T p2 -------------
    c_stats = pl.pallas_call(
        functools.partial(_pab_stats_kernel, s_valid=S, tj=tj,
                          need_mask=need_mask, exp_dtype=exp_dtype),
        out_shape=jax.ShapeDtypeStruct((S_pad, 1), F32),
        grid=(nsi, nsj),
        in_specs=[
            pl.BlockSpec((C8, ti), lambda i, j: (0, i)),
            pl.BlockSpec((C8, tj), lambda i, j: (0, j)),
        ],
        out_specs=pl.BlockSpec((ti, 1), lambda i, j: (i, 0)),
        scratch_shapes=[pltpu.VMEM((ti, 1), F32), pltpu.VMEM((ti, 1), F32)],
        compiler_params=pltpu.CompilerParams(
            dimension_semantics=("parallel", "arbitrary"),
            vmem_limit_bytes=vmem_limit),
        cost_estimate=pl.CostEstimate(
            flops=int(2 * C8 * S_pad * S_pad + 4 * S_pad * S_pad),
            transcendentals=int(S_pad * S_pad),
            bytes_accessed=int(2 * C8 * S_pad * S_pad * (1.0 / tj + 1.0 / ti)
                               + 4 * S_pad)),
    )(p2, p2)

    # ---- kernel 4: tiled PAB output + CAB output + residuals --------------
    out2d = pl.pallas_call(
        functools.partial(_combine_kernel, exp_dtype=exp_dtype),
        out_shape=jax.ShapeDtypeStruct((C, S_pad), F32),
        grid=(nsj, nsi),
        in_specs=[
            _const_spec((C, C)),                                 # att_c
            pl.BlockSpec((C, tj), lambda j, i: (0, j)),          # x1[:, j_blk]
            pl.BlockSpec((C, ti), lambda j, i: (0, i)),          # p1[:, i_blk]
            pl.BlockSpec((C8, ti), lambda j, i: (0, i)),         # p2[:, i_blk]
            pl.BlockSpec((C8, tj), lambda j, i: (0, j)),         # p2[:, j_blk]
            pl.BlockSpec((ti, 1), lambda j, i: (i, 0)),          # c[i_blk]
        ],
        out_specs=pl.BlockSpec((C, tj), lambda j, i: (0, j)),
        scratch_shapes=[pltpu.VMEM((C, tj), F32)],
        compiler_params=pltpu.CompilerParams(
            dimension_semantics=("parallel", "arbitrary"),
            vmem_limit_bytes=vmem_limit),
        cost_estimate=pl.CostEstimate(
            flops=int(2 * C8 * S_pad * S_pad + 2 * C * S_pad * S_pad
                      + 2 * C * C * S_pad),
            transcendentals=int(S_pad * S_pad),
            bytes_accessed=int(2 * C * C + 10 * C * S_pad + 2 * C8 * S_pad
                               + 4 * S_pad)),
    )(att_c, x1, p1, p2, p2, c_stats)

    if need_mask:
        out2d = out2d[:, :S]
    return out2d.reshape(n, C, d2, d3)


def _reference(x2d, w1, b1, wp1, bp1, wp2, bp2):
    """Pure-JAX mirror of the kernel math (bf16 MXU operands, bf16-stored x1,
    f32 accumulation), same formulas as the PyTorch DAM forward for N == 1."""
    def mm(a, b):
        return jnp.dot(a.astype(BF16), b.astype(BF16),
                       preferred_element_type=F32)
    x1 = jnp.maximum(mm(w1, x2d) + b1, 0.0)
    x1 = x1.astype(BF16).astype(F32)       # kernel stores x1 in bf16
    p1 = jnp.maximum(mm(wp1, x1) + bp1, 0.0)
    p2 = jnp.maximum(mm(wp2, x1) + bp2, 0.0)
    att_s = jax.nn.softmax(mm(p2.T, p2), axis=-1)
    pab = mm(p1, att_s) + x1
    att_c = jax.nn.softmax(mm(x1, x1.T), axis=-1)
    cab = mm(att_c, x1) + x1
    return pab + cab


if __name__ == "__main__":
    # DAM hardcodes 1024 channels; scaled to a small config (C divisible by 8).
    # Case 1: 16x16 -> S = 256 (exact tiling).  Case 2: 12x16 -> S = 192
    # (padded to 256, exercising the masking path).  ti=tj=128, tr=32 force
    # 2x2 / 2x2 grids so online stats, accumulation and row-split all run.
    C, C8 = 64, 8

    def run_case(d2, d3):
        S = d2 * d3
        key = jax.random.PRNGKey(0)
        ks = jax.random.split(key, 7)
        x = jax.random.normal(ks[0], (1, C, d2, d3), F32) * 0.5
        # 1x1 conv weights: PyTorch (C_out, C_in, 1, 1), stored squeezed.
        w1 = jax.random.normal(ks[1], (C, C), F32) * (0.5 / jnp.sqrt(C))
        b1 = jax.random.normal(ks[2], (C, 1), F32) * 0.05
        wp1 = jax.random.normal(ks[3], (C, C), F32) * (0.5 / jnp.sqrt(C))
        bp1 = jax.random.normal(ks[4], (C, 1), F32) * 0.05
        wp2 = jax.random.normal(ks[5], (C8, C), F32) * (0.5 / jnp.sqrt(C))
        bp2 = jax.random.normal(ks[6], (C8, 1), F32) * 0.05

        out = jax.block_until_ready(
            dam_forward(x, w1, b1, wp1, bp1, wp2, bp2, ti=128, tj=128, tr=32))
        ref = _reference(x.reshape(C, S), w1, b1, wp1, bp1, wp2, bp2)
        ref = ref.reshape(1, C, d2, d3)
        max_err = float(jnp.max(jnp.abs(out - ref)))
        assert jnp.allclose(out, ref, rtol=1e-2, atol=1e-2), (
            f"case {d2}x{d3}: max_err={max_err}")

    run_case(16, 16)   # S = 256, exact tiling
    run_case(12, 16)   # S = 192, padded + masked path
    print("KERNEL_OK")
</pallas_src>

<mosaic_0001>
module attributes {stable_mosaic.version = 11 : i64} {
  func.func @_proj_kernel(%arg0: i32, %arg1: memref<64x128xf32, #tpu.memory_space<vmem>>, %arg2: memref<64x64xbf16, #tpu.memory_space<vmem>>, %arg3: memref<64x1xf32, #tpu.memory_space<vmem>>, %arg4: memref<64x64xbf16, #tpu.memory_space<vmem>>, %arg5: memref<64x1xf32, #tpu.memory_space<vmem>>, %arg6: memref<8x64xbf16, #tpu.memory_space<vmem>>, %arg7: memref<8x1xf32, #tpu.memory_space<vmem>>, %arg8: memref<64x128xbf16, #tpu.memory_space<vmem>>, %arg9: memref<64x128xbf16, #tpu.memory_space<vmem>>, %arg10: memref<8x128xbf16, #tpu.memory_space<vmem>>) attributes {dimension_semantics = [#tpu.dimension_semantics<parallel>], iteration_bounds = array<i64: 2>, scalar_prefetch = 0 : i64, scratch_operands = 0 : i64, tpu.core_type = #tpu.core_type<tc>, window_params = [{transform_indices = @transform_0, window_bounds = array<i64: 64, 128>}, {pipeline_mode = #tpu.pipeline_mode<synchronous>, transform_indices = @transform_1, window_bounds = array<i64: 64, 64>}, {pipeline_mode = #tpu.pipeline_mode<synchronous>, transform_indices = @transform_2, window_bounds = array<i64: 64, 1>}, {pipeline_mode = #tpu.pipeline_mode<synchronous>, transform_indices = @transform_3, window_bounds = array<i64: 64, 64>}, {pipeline_mode = #tpu.pipeline_mode<synchronous>, transform_indices = @transform_4, window_bounds = array<i64: 64, 1>}, {pipeline_mode = #tpu.pipeline_mode<synchronous>, transform_indices = @transform_5, window_bounds = array<i64: 8, 64>}, {pipeline_mode = #tpu.pipeline_mode<synchronous>, transform_indices = @transform_6, window_bounds = array<i64: 8, 1>}, {transform_indices = @transform_7, window_bounds = array<i64: 64, 128>}, {transform_indices = @transform_8, window_bounds = array<i64: 64, 128>}, {transform_indices = @transform_9, window_bounds = array<i64: 8, 128>}]} {
    %c0 = arith.constant 0 : index
    %c0_0 = arith.constant 0 : index
    %0 = vector.load %arg1[%c0, %c0_0] : memref<64x128xf32, #tpu.memory_space<vmem>>, vector<64x128xf32>
    %1 = arith.truncf %0 : vector<64x128xf32> to vector<64x128xbf16>
    %c0_1 = arith.constant 0 : index
    %c0_2 = arith.constant 0 : index
    %2 = vector.load %arg2[%c0_1, %c0_2] : memref<64x64xbf16, #tpu.memory_space<vmem>>, vector<64x64xbf16>
    %cst = arith.constant dense<0.000000e+00> : vector<64x128xf32>
    %3 = tpu.matmul %2, %1, %cst {dimension_numbers = #tpu.dot_dimension_numbers<[1], [0], [0], [1], [0, 0, 1, 1], [], []>} : vector<64x64xbf16>, vector<64x128xbf16>, vector<64x128xf32> -> vector<64x128xf32>
    %c0_3 = arith.constant 0 : index
    %c0_4 = arith.constant 0 : index
    %4 = vector.load %arg3[%c0_3, %c0_4] : memref<64x1xf32, #tpu.memory_space<vmem>>, vector<64x1xf32>
    %5 = vector.broadcast %4 : vector<64x1xf32> to vector<64x128xf32>
    %6 = arith.addf %3, %5 : vector<64x128xf32>
    %cst_5 = arith.constant 0.000000e+00 : f32
    %7 = vector.broadcast %cst_5 : f32 to vector<64x128xf32>
    %8 = arith.maximumf %6, %7 : vector<64x128xf32>
    %9 = arith.truncf %8 : vector<64x128xf32> to vector<64x128xbf16>
    %c0_6 = arith.constant 0 : index
    %c0_7 = arith.constant 0 : index
    %10 = vector.load %arg4[%c0_6, %c0_7] : memref<64x64xbf16, #tpu.memory_space<vmem>>, vector<64x64xbf16>
    %cst_8 = arith.constant dense<0.000000e+00> : vector<64x128xf32>
    %11 = tpu.matmul %10, %9, %cst_8 {dimension_numbers = #tpu.dot_dimension_numbers<[1], [0], [0], [1], [0, 0, 1, 1], [], []>} : vector<64x64xbf16>, vector<64x128xbf16>, vector<64x128xf32> -> vector<64x128xf32>
    %c0_9 = arith.constant 0 : index
    %c0_10 = arith.constant 0 : index
    %12 = vector.load %arg5[%c0_9, %c0_10] : memref<64x1xf32, #tpu.memory_space<vmem>>, vector<64x1xf32>
    %13 = vector.broadcast %12 : vector<64x1xf32> to vector<64x128xf32>
    %14 = arith.addf %11, %13 : vector<64x128xf32>
    %cst_11 = arith.constant 0.000000e+00 : f32
    %15 = vector.broadcast %cst_11 : f32 to vector<64x128xf32>
    %16 = arith.maximumf %14, %15 : vector<64x128xf32>
    %c0_12 = arith.constant 0 : index
    %c0_13 = arith.constant 0 : index
    %17 = vector.load %arg6[%c0_12, %c0_13] : memref<8x64xbf16, #tpu.memory_space<vmem>>, vector<8x64xbf16>
    %cst_14 = arith.constant dense<0.000000e+00> : vector<8x128xf32>
    %18 = tpu.matmul %17, %9, %cst_14 {dimension_numbers = #tpu.dot_dimension_numbers<[1], [0], [0], [1], [0, 0, 1, 1], [], []>} : vector<8x64xbf16>, vector<64x128xbf16>, vector<8x128xf32> -> vector<8x128xf32>
    %c0_15 = arith.constant 0 : index
    %c0_16 = arith.constant 0 : index
    %19 = vector.load %arg7[%c0_15, %c0_16] : memref<8x1xf32, #tpu.memory_space<vmem>>, vector<8x1xf32>
    %20 = vector.broadcast %19 : vector<8x1xf32> to vector<8x128xf32>
    %21 = arith.addf %18, %20 : vector<8x128xf32>
    %cst_17 = arith.constant 0.000000e+00 : f32
    %22 = vector.broadcast %cst_17 : f32 to vector<8x128xf32>
    %23 = arith.maximumf %21, %22 : vector<8x128xf32>
    %24 = arith.truncf %8 : vector<64x128xf32> to vector<64x128xbf16>
    %c0_18 = arith.constant 0 : index
    %c0_19 = arith.constant 0 : index
    %25 = vector.load %arg8[%c0_18, %c0_19] : memref<64x128xbf16, #tpu.memory_space<vmem>>, vector<64x128xbf16>
    tpu.vector_store %arg8[%c0_18, %c0_19], %24 {strides = array<i32>} : memref<64x128xbf16, #tpu.memory_space<vmem>>, vector<64x128xbf16>,
    %26 = arith.truncf %16 : vector<64x128xf32> to vector<64x128xbf16>
    %c0_20 = arith.constant 0 : index
    %c0_21 = arith.constant 0 : index
    %27 = vector.load %arg9[%c0_20, %c0_21] : memref<64x128xbf16, #tpu.memory_space<vmem>>, vector<64x128xbf16>
    tpu.vector_store %arg9[%c0_20, %c0_21], %26 {strides = array<i32>} : memref<64x128xbf16, #tpu.memory_space<vmem>>, vector<64x128xbf16>,
    %28 = arith.truncf %23 : vector<8x128xf32> to vector<8x128xbf16>
    %c0_22 = arith.constant 0 : index
    %c0_23 = arith.constant 0 : index
    %29 = vector.load %arg10[%c0_22, %c0_23] : memref<8x128xbf16, #tpu.memory_space<vmem>>, vector<8x128xbf16>
    tpu.vector_store %arg10[%c0_22, %c0_23], %28 {strides = array<i32>} : memref<8x128xbf16, #tpu.memory_space<vmem>>, vector<8x128xbf16>,
    return
  }
  func.func @transform_0(%arg0: i32) -> (i32, i32) {
    %c0_i32 = arith.constant 0 : i32
    %c0_i32_0 = arith.constant 0 : i32
    return %c0_i32, %arg0 : i32, i32
  }
  func.func @transform_1(%arg0: i32) -> (i32, i32) {
    %c0_i32 = arith.constant 0 : i32
    %c0_i32_0 = arith.constant 0 : i32
    %c0_i32_1 = arith.constant 0 : i32
    return %c0_i32, %c0_i32_0 : i32, i32
  }
  func.func @transform_2(%arg0: i32) -> (i32, i32) {
    %c0_i32 = arith.constant 0 : i32
    %c0_i32_0 = arith.constant 0 : i32
    %c0_i32_1 = arith.constant 0 : i32
    return %c0_i32, %c0_i32_0 : i32, i32
  }
  func.func @transform_3(%arg0: i32) -> (i32, i32) {
    %c0_i32 = arith.constant 0 : i32
    %c0_i32_0 = arith.constant 0 : i32
    %c0_i32_1 = arith.constant 0 : i32
    return %c0_i32, %c0_i32_0 : i32, i32
  }
  func.func @transform_4(%arg0: i32) -> (i32, i32) {
    %c0_i32 = arith.constant 0 : i32
    %c0_i32_0 = arith.constant 0 : i32
    %c0_i32_1 = arith.constant 0 : i32
    return %c0_i32, %c0_i32_0 : i32, i32
  }
  func.func @transform_5(%arg0: i32) -> (i32, i32) {
    %c0_i32 = arith.constant 0 : i32
    %c0_i32_0 = arith.constant 0 : i32
    %c0_i32_1 = arith.constant 0 : i32
    return %c0_i32, %c0_i32_0 : i32, i32
  }
  func.func @transform_6(%arg0: i32) -> (i32, i32) {
    %c0_i32 = arith.constant 0 : i32
    %c0_i32_0 = arith.constant 0 : i32
    %c0_i32_1 = arith.constant 0 : i32
    return %c0_i32, %c0_i32_0 : i32, i32
  }
  func.func @transform_7(%arg0: i32) -> (i32, i32) {
    %c0_i32 = arith.constant 0 : i32
    %c0_i32_0 = arith.constant 0 : i32
    return %c0_i32, %arg0 : i32, i32
  }
  func.func @transform_8(%arg0: i32) -> (i32, i32) {
    %c0_i32 = arith.constant 0 : i32
    %c0_i32_0 = arith.constant 0 : i32
    return %c0_i32, %arg0 : i32, i32
  }
  func.func @transform_9(%arg0: i32) -> (i32, i32) {
    %c0_i32 = arith.constant 0 : i32
    %c0_i32_0 = arith.constant 0 : i32
    return %c0_i32, %arg0 : i32, i32
  }
}

</mosaic_0001>

<llo_original>
// kernel: tpu_custom_call.1
$region0: #{tpu_custom_call.1}
  #allocation0 [shape = 'u32[]', space=smem, size = 0x4, offset = 0x4, fixed_abs, tag = 'smem constant byte address 0x4 - core index']
  #allocation1 [shape = 'u32[144,128]{1,0:T(1,128)}', space=vmem, size = 0x12000, scoped, tag = 'internal scratch']
  %s0 = inlined_call_operand.vmem [shape: f32[64,256], index: 0, kind: input, shape index: {}]
  %s1 = inlined_call_operand.hbm [shape: bf16[64,64], index: 1, kind: input, shape index: {}]
  %s2 = inlined_call_operand.vmem [shape: f32[64,1], index: 2, kind: input, shape index: {}]
  %s3 = inlined_call_operand.hbm [shape: bf16[64,64], index: 3, kind: input, shape index: {}]
  %s4 = inlined_call_operand.vmem [shape: f32[64,1], index: 4, kind: input, shape index: {}]
  %s5 = inlined_call_operand.vmem [shape: bf16[8,64], index: 5, kind: input, shape index: {}]
  %s6 = inlined_call_operand.vmem [shape: f32[8,1], index: 6, kind: input, shape index: {}]
  %s7 = inlined_call_operand.hbm [shape: bf16[64,256], index: 7, kind: output, shape index: {0}]
  %s8 = inlined_call_operand.hbm [shape: bf16[64,256], index: 8, kind: output, shape index: {1}]
  %s9 = inlined_call_operand.hbm [shape: bf16[8,256], index: 9, kind: output, shape index: {2}]
  %10 = xla_tuple %s7, %s8, %s9
  %s11 = sld [smem:[#allocation0]]
  $region123: #{tpu_custom_call.1} parent=0
    _
  %s13 = ssub.s32 1, %s11
  %s14 = scalar_select 0, %s13, %s11
  $region1: #{tpu_custom_call.1} parent=0
    #allocation2 [shape = 'u8[65536]{0}', space=vmem, size = 0x10000, scoped, tag = 'input window, operand 0']
    #allocation3 [shape = 'u8[16384]{0}', space=vmem, size = 0x4000, scoped, tag = 'input window, operand 1, single buffered']
    #allocation4 [shape = 's32[2]{0}', space=sflag, size = 0x8, scoped, tag = 'scoped memory for tpu_custom_call.1']
    #allocation5 [shape = 's32[2]{0}', space=sflag, size = 0x8, scoped, tag = 'scoped memory for tpu_custom_call.1']
    #allocation6 [shape = 'u8[16384]{0}', space=vmem, size = 0x4000, scoped, tag = 'input window, operand 3, single buffered']
    #allocation7 [shape = 's32[1]{0}', space=sflag, size = 0x4, scoped, tag = 'scoped memory for tpu_custom_call.1']
    #allocation8 [shape = 'u8[32768]{0}', space=vmem, size = 0x8000, scoped, tag = 'output window, operand 0']
    #allocation9 [shape = 'u8[32768]{0}', space=vmem, size = 0x8000, scoped, tag = 'output window, operand 1']
    #allocation10 [shape = 's32[2]{0}', space=sflag, size = 0x8, scoped, tag = 'scoped memory for tpu_custom_call.1']
    #allocation11 [shape = 'u8[4096]{0}', space=vmem, size = 0x1000, scoped, tag = 'output window, operand 2']
    %15 = vsyncpa [#allocation4], 0
    %16 = vsyncpa [#allocation7], 0
    %17 = vsyncpa [#allocation5], 0
    %s18 = scalar_lea.sflag [#allocation5], 1
    %19 = vsyncpa %s18, 0
    %20 = vsyncpa [#allocation10], 0
    %s21 = scalar_lea.sflag [#allocation10], 1
    %22 = vsyncpa %s21, 0
    loop: start=0, step=1, limit=4
    $region2: #{tpu_custom_call.1} parent=1 // loop_pre_header
      _
    $region3: #{tpu_custom_call.1} parent=1 // loop_header
      %s24 = sphi 0, %s28
      %p25 = scmp.ge.s32.totalorder %s24, 4
      %s34 = sphi 0, %s36
      %s37 = sphi 0, %s34
      %s38 = sphi 0, %s37
      %s54 = sphi 0, %s38
      %s58 = sphi 0, %s58
      %s60 = sphi 0, %s58
      %s61 = sphi 0, %s60
      %s75 = sphi 0, %s61
      %s79 = sphi 0, %s79
      %s81 = sphi 0, %s79
      %s82 = sphi 0, %s81
      %s96 = sphi 0, %s82
      %s100 = sphi 0, %s100
      %s102 = sphi 0, %s100
      %s103 = sphi 0, %s102
      %s117 = sphi 0, %s103
      %s121 = sphi 0, %s121
      %s123 = sphi 0, %s121
      %s124 = sphi 0, %s123
      %s138 = sphi 0, %s124
      %s142 = sphi 0, %s142
      %s144 = sphi 0, %s142
      %s145 = sphi 0, %s144
      %s159 = sphi 0, %s145
      %s163 = sphi 0, %s163
      %s165 = sphi 0, %s163
      %s166 = sphi 0, %s165
      %s180 = sphi 0, %s166
      %s186 = sphi 0, %s188
      %s189 = sphi 0, %s186
      %s190 = sphi 0, %s189
      %s206 = sphi 0, %s190
      %s212 = sphi 0, %s214
      %s215 = sphi 0, %s212
      %s216 = sphi 0, %s215
      %s232 = sphi 0, %s216
      %s238 = sphi 0, %s240
      %s241 = sphi 0, %s238
      %s242 = sphi 0, %s241
      %s258 = sphi 0, %s242
    $region4: #{tpu_custom_call.1} parent=1 // loop_header_branch
      %27 = sbr.rel (%p25) target = $region8
    $region5: #{tpu_custom_call.1} parent=1 // loop_body
      %s29 = ssub.s32 %s24, 1
      %s30 = ssub.s32 %s24, 2
      %s31 = sadd.s32 %s24, 1
      %s32 = ssub.s32 %s24, %s31
      %p33 = scmp.eq.s32.totalorder %s32, 0
      %s35 = sadd.s32 %s34, 1
      %s36 = scalar_select %p33, %s34, %s35
      %p39 = pneg %p33
      %p40 = scmp.eq.s32.totalorder %s24, 1
      %p41 = por %p39, %p40
      %p42 = scmp.ne.s32.totalorder %s34, %s37
      %p43 = scmp.eq.s32.totalorder %s24, 0
      %p44 = por %p42, %p43
      %p45 = scmp.ne.s32.totalorder %s34, %s37
      %p46 = scmp.eq.s32.totalorder %s29, 1
      %p47 = por %p45, %p46
      %p48 = scmp.ne.s32.totalorder %s37, %s38
      %p49 = scmp.eq.s32.totalorder %s29, 0
      %p50 = por %p48, %p49
      %p51 = scmp.ne.s32.totalorder %s37, %s38
      %p52 = scmp.eq.s32.totalorder %s30, 1
      %p53 = por %p51, %p52
      %p55 = scmp.ne.s32.totalorder %s38, %s54
      %p56 = scmp.eq.s32.totalorder %s30, 0
      %p57 = por %p55, %p56
      %s59 = sadd.s32 %s58, 1
      %p62 = scmp.eq.s32.totalorder %s24, 1
      %p63 = scmp.ne.s32.totalorder %s58, %s60
      %p64 = scmp.eq.s32.totalorder %s24, 0
      %p65 = por %p63, %p64
      %p66 = scmp.ne.s32.totalorder %s58, %s60
      %p67 = scmp.eq.s32.totalorder %s29, 1
      %p68 = por %p66, %p67
      %p69 = scmp.ne.s32.totalorder %s60, %s61
      %p70 = scmp.eq.s32.totalorder %s29, 0
      %p71 = por %p69, %p70
      %p72 = scmp.ne.s32.totalorder %s60, %s61
      %p73 = scmp.eq.s32.totalorder %s30, 1
      %p74 = por %p72, %p73
      %p76 = scmp.ne.s32.totalorder %s61, %s75
      %p77 = scmp.eq.s32.totalorder %s30, 0
      %p78 = por %p76, %p77
      %s80 = sadd.s32 %s79, 1
      %p83 = scmp.eq.s32.totalorder %s24, 1
      %p84 = scmp.ne.s32.totalorder %s79, %s81
      %p85 = scmp.eq.s32.totalorder %s24, 0
      %p86 = por %p84, %p85
      %p87 = scmp.ne.s32.totalorder %s79, %s81
      %p88 = scmp.eq.s32.totalorder %s29, 1
      %p89 = por %p87, %p88
      %p90 = scmp.ne.s32.totalorder %s81, %s82
      %p91 = scmp.eq.s32.totalorder %s29, 0
      %p92 = por %p90, %p91
      %p93 = scmp.ne.s32.totalorder %s81, %s82
      %p94 = scmp.eq.s32.totalorder %s30, 1
      %p95 = por %p93, %p94
      %p97 = scmp.ne.s32.totalorder %s82, %s96
      %p98 = scmp.eq.s32.totalorder %s30, 0
      %p99 = por %p97, %p98
      %s101 = sadd.s32 %s100, 1
      %p104 = scmp.eq.s32.totalorder %s24, 1
      %p105 = scmp.ne.s32.totalorder %s100, %s102
      %p106 = scmp.eq.s32.totalorder %s24, 0
      %p107 = por %p105, %p106
      %p108 = scmp.ne.s32.totalorder %s100, %s102
      %p109 = scmp.eq.s32.totalorder %s29, 1
      %p110 = por %p108, %p109
      %p111 = scmp.ne.s32.totalorder %s102, %s103
      %p112 = scmp.eq.s32.totalorder %s29, 0
      %p113 = por %p111, %p112
      %p114 = scmp.ne.s32.totalorder %s102, %s103
      %p115 = scmp.eq.s32.totalorder %s30, 1
      %p116 = por %p114, %p115
      %p118 = scmp.ne.s32.totalorder %s103, %s117
      %p119 = scmp.eq.s32.totalorder %s30, 0
      %p120 = por %p118, %p119
      %s122 = sadd.s32 %s121, 1
      %p125 = scmp.eq.s32.totalorder %s24, 1
      %p126 = scmp.ne.s32.totalorder %s121, %s123
      %p127 = scmp.eq.s32.totalorder %s24, 0
      %p128 = por %p126, %p127
      %p129 = scmp.ne.s32.totalorder %s121, %s123
      %p130 = scmp.eq.s32.totalorder %s29, 1
      %p131 = por %p129, %p130
      %p132 = scmp.ne.s32.totalorder %s123, %s124
      %p133 = scmp.eq.s32.totalorder %s29, 0
      %p134 = por %p132, %p133
      %p135 = scmp.ne.s32.totalorder %s123, %s124
      %p136 = scmp.eq.s32.totalorder %s30, 1
      %p137 = por %p135, %p136
      %p139 = scmp.ne.s32.totalorder %s124, %s138
      %p140 = scmp.eq.s32.totalorder %s30, 0
      %p141 = por %p139, %p140
      %s143 = sadd.s32 %s142, 1
      %p146 = scmp.eq.s32.totalorder %s24, 1
      %p147 = scmp.ne.s32.totalorder %s142, %s144
      %p148 = scmp.eq.s32.totalorder %s24, 0
      %p149 = por %p147, %p148
      %p150 = scmp.ne.s32.totalorder %s142, %s144
      %p151 = scmp.eq.s32.totalorder %s29, 1
      %p152 = por %p150, %p151
      %p153 = scmp.ne.s32.totalorder %s144, %s145
      %p154 = scmp.eq.s32.totalorder %s29, 0
      %p155 = por %p153, %p154
      %p156 = scmp.ne.s32.totalorder %s144, %s145
      %p157 = scmp.eq.s32.totalorder %s30, 1
      %p158 = por %p156, %p157
      %p160 = scmp.ne.s32.totalorder %s145, %s159
      %p161 = scmp.eq.s32.totalorder %s30, 0
      %p162 = por %p160, %p161
      %s164 = sadd.s32 %s163, 1
      %p167 = scmp.eq.s32.totalorder %s24, 1
      %p168 = scmp.ne.s32.totalorder %s163, %s165
      %p169 = scmp.eq.s32.totalorder %s24, 0
      %p170 = por %p168, %p169
      %p171 = scmp.ne.s32.totalorder %s163, %s165
      %p172 = scmp.eq.s32.totalorder %s29, 1
      %p173 = por %p171, %p172
      %p174 = scmp.ne.s32.totalorder %s165, %s166
      %p175 = scmp.eq.s32.totalorder %s29, 0
      %p176 = por %p174, %p175
      %p177 = scmp.ne.s32.totalorder %s165, %s166
      %p178 = scmp.eq.s32.totalorder %s30, 1
      %p179 = por %p177, %p178
      %p181 = scmp.ne.s32.totalorder %s166, %s180
      %p182 = scmp.eq.s32.totalorder %s30, 0
      %p183 = por %p181, %p182
      %s184 = ssub.s32 %s24, %s31
      %p185 = scmp.eq.s32.totalorder %s184, 0
      %s187 = sadd.s32 %s186, 1
      %s188 = scalar_select %p185, %s186, %s187
      %p191 = pneg %p185
      %p192 = scmp.eq.s32.totalorder %s24, 1
      %p193 = por %p191, %p192
      %p194 = scmp.ne.s32.totalorder %s186, %s189
      %p195 = scmp.eq.s32.totalorder %s24, 0
      %p196 = por %p194, %p195
      %p197 = scmp.ne.s32.totalorder %s186, %s189
      %p198 = scmp.eq.s32.totalorder %s29, 1
      %p199 = por %p197, %p198
      %p200 = scmp.ne.s32.totalorder %s189, %s190
      %p201 = scmp.eq.s32.totalorder %s29, 0
      %p202 = por %p200, %p201
      %p203 = scmp.ne.s32.totalorder %s189, %s190
      %p204 = scmp.eq.s32.totalorder %s30, 1
      %p205 = por %p203, %p204
      %p207 = scmp.ne.s32.totalorder %s190, %s206
      %p208 = scmp.eq.s32.totalorder %s30, 0
      %p209 = por %p207, %p208
      %s210 = ssub.s32 %s24, %s31
      %p211 = scmp.eq.s32.totalorder %s210, 0
      %s213 = sadd.s32 %s212, 1
      %s214 = scalar_select %p211, %s212, %s213
      %p217 = pneg %p211
      %p218 = scmp.eq.s32.totalorder %s24, 1
      %p219 = por %p217, %p218
      %p220 = scmp.ne.s32.totalorder %s212, %s215
      %p221 = scmp.eq.s32.totalorder %s24, 0
      %p222 = por %p220, %p221
      %p223 = scmp.ne.s32.totalorder %s212, %s215
      %p224 = scmp.eq.s32.totalorder %s29, 1
      %p225 = por %p223, %p224
      %p226 = scmp.ne.s32.totalorder %s215, %s216
      %p227 = scmp.eq.s32.totalorder %s29, 0
      %p228 = por %p226, %p227
      %p229 = scmp.ne.s32.totalorder %s215, %s216
      %p230 = scmp.eq.s32.totalorder %s30, 1
      %p231 = por %p229, %p230
      %p233 = scmp.ne.s32.totalorder %s216, %s232
      %p234 = scmp.eq.s32.totalorder %s30, 0
      %p235 = por %p233, %p234
      %s236 = ssub.s32 %s24, %s31
      %p237 = scmp.eq.s32.totalorder %s236, 0
      %s239 = sadd.s32 %s238, 1
      %s240 = scalar_select %p237, %s238, %s239
      %p243 = pneg %p237
      %p244 = scmp.eq.s32.totalorder %s24, 1
      %p245 = por %p243, %p244
      %p246 = scmp.ne.s32.totalorder %s238, %s241
      %p247 = scmp.eq.s32.totalorder %s24, 0
      %p248 = por %p246, %p247
      %p249 = scmp.ne.s32.totalorder %s238, %s241
      %p250 = scmp.eq.s32.totalorder %s29, 1
      %p251 = por %p249, %p250
      %p252 = scmp.ne.s32.totalorder %s241, %s242
      %p253 = scmp.eq.s32.totalorder %s29, 0
      %p254 = por %p252, %p253
      %p255 = scmp.ne.s32.totalorder %s241, %s242
      %p256 = scmp.eq.s32.totalorder %s30, 1
      %p257 = por %p255, %p256
      %p259 = scmp.ne.s32.totalorder %s242, %s258
      %p260 = scmp.eq.s32.totalorder %s30, 0
      %p261 = por %p259, %p260
      %p262 = scmp.le.s32.totalorder 1, %s24
      %p263 = scmp.lt.s32.totalorder %s24, 3
      %p264 = pnand %p262, %p263
      %p265 = pneg %p264
      // Predicated region
      $region9: #{tpu_custom_call.1} parent=5 // pred_check
        _
      $region10: #{tpu_custom_call.1} parent=5 // pred_check_branch
        %267 = sbr.rel (%p264) target = $region12
      $region11: #{tpu_custom_call.1} parent=5 // pred_region
        %s268 = ssub.s32 %s24, 1
        // Predicated region
        $region13: #{tpu_custom_call.1} parent=11 // pred_check
          %p269 = pneg %p71
        $region14: #{tpu_custom_call.1} parent=11 // pred_check_branch
          %271 = sbr.rel (%p269) target = $region16
        $region15: #{tpu_custom_call.1} parent=11 // pred_region
          %s273 = ssub.s32 512, 512
          %274 = vsyncadd [#allocation4], %s273
          %s275 = sshll.u32 [#allocation3], 4
          %s276 = int_to_ptr.vmem [resolvable:$true] %s275
          %281 = dma.hbm_to_vmem [thread:$0]  %s1, 512, %s276, [#allocation4], 64, 64, 4
        $region16: #{tpu_custom_call.1} parent=11 // pred_fallthru
          _
        // Predicated region
        $region17: #{tpu_custom_call.1} parent=11 // pred_check
          %p282 = pneg %p92
        $region18: #{tpu_custom_call.1} parent=11 // pred_check_branch
          %284 = sbr.rel (%p282) target = $region20
        $region19: #{tpu_custom_call.1} parent=11 // pred_region
          _
        $region20: #{tpu_custom_call.1} parent=11 // pred_fallthru
          _
        // Predicated region
        $region21: #{tpu_custom_call.1} parent=11 // pred_check
          %p285 = pneg %p113
        $region22: #{tpu_custom_call.1} parent=11 // pred_check_branch
          %287 = sbr.rel (%p285) target = $region24
        $region23: #{tpu_custom_call.1} parent=11 // pred_region
          %s289 = ssub.s32 512, 512
          %290 = vsyncadd [#allocation7], %s289
          %s291 = sshll.u32 [#allocation6], 4
          %s292 = int_to_ptr.vmem [resolvable:$true] %s291
          %297 = dma.hbm_to_vmem [thread:$0]  %s3, 512, %s292, [#allocation7], 64, 64, 4
        $region24: #{tpu_custom_call.1} parent=11 // pred_fallthru
          _
        // Predicated region
        $region25: #{tpu_custom_call.1} parent=11 // pred_check
          %p298 = pneg %p134
        $region26: #{tpu_custom_call.1} parent=11 // pred_check_branch
          %300 = sbr.rel (%p298) target = $region28
        $region27: #{tpu_custom_call.1} parent=11 // pred_region
          _
        $region28: #{tpu_custom_call.1} parent=11 // pred_fallthru
          _
        // Predicated region
        $region29: #{tpu_custom_call.1} parent=11 // pred_check
          %p301 = pneg %p155
        $region30: #{tpu_custom_call.1} parent=11 // pred_check_branch
          %303 = sbr.rel (%p301) target = $region32
        $region31: #{tpu_custom_call.1} parent=11 // pred_region
          _
        $region32: #{tpu_custom_call.1} parent=11 // pred_fallthru
          _
        // Predicated region
        $region33: #{tpu_custom_call.1} parent=11 // pred_check
          %p304 = pneg %p176
        $region34: #{tpu_custom_call.1} parent=11 // pred_check_branch
          %306 = sbr.rel (%p304) target = $region36
        $region35: #{tpu_custom_call.1} parent=11 // pred_region
          _
        $region36: #{tpu_custom_call.1} parent=11 // pred_fallthru
          _
      $region12: #{tpu_custom_call.1} parent=5 // pred_fallthru
        _
      %p307 = scmp.lt.s32.totalorder %s24, 2
      // Predicated region
      $region37: #{tpu_custom_call.1} parent=5 // pred_check
        %p308 = pneg %p307
      $region38: #{tpu_custom_call.1} parent=5 // pred_check_branch
        %310 = sbr.rel (%p308) target = $region40
      $region39: #{tpu_custom_call.1} parent=5 // pred_region
        // Predicated region
        $region41: #{tpu_custom_call.1} parent=39 // pred_check
          %p311 = pneg %p44
        $region42: #{tpu_custom_call.1} parent=39 // pred_check_branch
          %313 = sbr.rel (%p311) target = $region44
        $region43: #{tpu_custom_call.1} parent=39 // pred_region
          %s314 = sand.u32 %s34, 1
          %s315 = sand.u32 %s34, 1
          %s316 = smul.addr %s315, 64
          %s317 = scalar_lea.vmem [#allocation2], %s316
          %s318 = smul.addr %s24, 8
          %s319 = scalar_lea.vmem %s0, %s318
          // Predicated region
          $region45: #{tpu_custom_call.1} parent=43 // pred_check
            _
          $region46: #{tpu_custom_call.1} parent=43 // pred_check_branch
            %321 = sbr.rel (0) target = $region48
          $region47: #{tpu_custom_call.1} parent=43 // pred_region
            // Predicated region
            $region49: #{tpu_custom_call.1} parent=47 // pred_check
              _
            $region50: #{tpu_custom_call.1} parent=47 // pred_check_branch
              %323 = sbr.rel (0) target = $region52
            $region51: #{tpu_custom_call.1} parent=47 // pred_region
              // Predicated region
              $region64: #{tpu_custom_call.1} parent=51 // pred_check
                _
              $region65: #{tpu_custom_call.1} parent=51 // pred_check_branch
                %353 = sbr.rel (0) target = $region67
              $region66: #{tpu_custom_call.1} parent=51 // pred_region
                loop: start=0, step=1, limit=1
                $region68: #{tpu_custom_call.1} parent=66 // loop_pre_header
                  _
                $region69: #{tpu_custom_call.1} parent=66 // loop_header
                  %s355 = sphi 0, %s359
                  %p356 = scmp.ge.s32.totalorder %s355, 1
                  %s360 = sphi %s319, %s319
                  %s361 = sphi %s317, %s317
                $region70: #{tpu_custom_call.1} parent=66 // loop_header_branch
                  %358 = sbr.rel (%p356) target = $region74
                $region71: #{tpu_custom_call.1} parent=66 // loop_body
                  %v362 = vld [vmem:[%s360] sm:$0xff]
                  %363 = vst [vmem:[%s361] sm:$0xff] %v362
                  %v364 = vld [vmem:[%s360 + $0x10] sm:$0xff]
                  %365 = vst [vmem:[%s361 + $0x8] sm:$0xff] %v364
                  %v366 = vld [vmem:[%s360 + $0x20] sm:$0xff]
                  %367 = vst [vmem:[%s361 + $0x10] sm:$0xff] %v366
                  %v368 = vld [vmem:[%s360 + $0x30] sm:$0xff]
                  %369 = vst [vmem:[%s361 + $0x18] sm:$0xff] %v368
                  %v370 = vld [vmem:[%s360 + $0x40] sm:$0xff]
                  %371 = vst [vmem:[%s361 + $0x20] sm:$0xff] %v370
                  %v372 = vld [vmem:[%s360 + $0x50] sm:$0xff]
                  %373 = vst [vmem:[%s361 + $0x28] sm:$0xff] %v372
                  %v374 = vld [vmem:[%s360 + $0x60] sm:$0xff]
                  %375 = vst [vmem:[%s361 + $0x30] sm:$0xff] %v374
                  %v376 = vld [vmem:[%s360 + $0x70] sm:$0xff]
                  %377 = vst [vmem:[%s361 + $0x38] sm:$0xff] %v376
                $region72: #{tpu_custom_call.1} parent=66 // loop_footer
                  %s359 = sadd.s32 1, %s355
                $region73: #{tpu_custom_call.1} parent=66 // loop_footer_branch
                  %354 = sbr.rel target = $region69
                $region74: #{tpu_custom_call.1} parent=66 // loop_exit
                  _
              $region67: #{tpu_custom_call.1} parent=51 // pred_fallthru
                _
              // Predicated region
              $region75: #{tpu_custom_call.1} parent=51 // pred_check
                _
              $region76: #{tpu_custom_call.1} parent=51 // pred_check_branch
                %379 = sbr.rel target = $region78
              $region77: #{tpu_custom_call.1} parent=51 // pred_region
                _
              $region78: #{tpu_custom_call.1} parent=51 // pred_fallthru
                _
            $region52: #{tpu_custom_call.1} parent=47 // pred_fallthru
              _
            // Predicated region
            $region53: #{tpu_custom_call.1} parent=47 // pred_check
              _
            $region54: #{tpu_custom_call.1} parent=47 // pred_check_branch
              %325 = sbr.rel target = $region56
            $region55: #{tpu_custom_call.1} parent=47 // pred_region
              %s327 = ssub.s32 256, 1
              loop: start=0, step=1, limit=1
              $region57: #{tpu_custom_call.1} parent=55 // loop_pre_header
                _
              $region58: #{tpu_custom_call.1} parent=55 // loop_header
                %s329 = sphi 0, %s333
                %p330 = scmp.ge.s32.totalorder %s329, 1
                %s334 = sphi %s319, %s319
                %s335 = sphi %s317, %s317
              $region59: #{tpu_custom_call.1} parent=55 // loop_header_branch
                %332 = sbr.rel (%p330) target = $region63
              $region60: #{tpu_custom_call.1} parent=55 // loop_body
                %v336 = vld [vmem:[%s334] sm:%s327]
                %337 = vst [vmem:[%s335] sm:%s327] %v336
                %v338 = vld [vmem:[%s334 + $0x10] sm:%s327]
                %339 = vst [vmem:[%s335 + $0x8] sm:%s327] %v338
                %v340 = vld [vmem:[%s334 + $0x20] sm:%s327]
                %341 = vst [vmem:[%s335 + $0x10] sm:%s327] %v340
                %v342 = vld [vmem:[%s334 + $0x30] sm:%s327]
                %343 = vst [vmem:[%s335 + $0x18] sm:%s327] %v342
                %v344 = vld [vmem:[%s334 + $0x40] sm:%s327]
                %345 = vst [vmem:[%s335 + $0x20] sm:%s327] %v344
                %v346 = vld [vmem:[%s334 + $0x50] sm:%s327]
                %347 = vst [vmem:[%s335 + $0x28] sm:%s327] %v346
                %v348 = vld [vmem:[%s334 + $0x60] sm:%s327]
                %349 = vst [vmem:[%s335 + $0x30] sm:%s327] %v348
                %v350 = vld [vmem:[%s334 + $0x70] sm:%s327]
                %351 = vst [vmem:[%s335 + $0x38] sm:%s327] %v350
              $region61: #{tpu_custom_call.1} parent=55 // loop_footer
                %s333 = sadd.s32 1, %s329
              $region62: #{tpu_custom_call.1} parent=55 // loop_footer_branch
                %328 = sbr.rel target = $region58
              $region63: #{tpu_custom_call.1} parent=55 // loop_exit
                _
            $region56: #{tpu_custom_call.1} parent=47 // pred_fallthru
              _
          $region48: #{tpu_custom_call.1} parent=43 // pred_fallthru
            _
          %380 = vnop
        $region44: #{tpu_custom_call.1} parent=39 // pred_fallthru
          _
      $region40: #{tpu_custom_call.1} parent=5 // pred_fallthru
        _
      %p381 = scmp.le.s32.totalorder 1, %s24
      %p382 = scmp.lt.s32.totalorder %s24, 3
      %p383 = pnand %p381, %p382
      %p384 = pneg %p383
      // Predicated region
      $region79: #{tpu_custom_call.1} parent=5 // pred_check
        _
      $region80: #{tpu_custom_call.1} parent=5 // pred_check_branch
        %386 = sbr.rel (%p383) target = $region82
      $region81: #{tpu_custom_call.1} parent=5 // pred_region
        %s387 = ssub.s32 %s24, 1
        %s388 = sand.u32 %s37, 1
        %s389 = sand.u32 %s37, 1
        %s390 = smul.addr %s389, 64
        %s391 = scalar_lea.vmem [#allocation2], %s390
        // Predicated region
        $region83: #{tpu_custom_call.1} parent=81 // pred_check
          %p392 = pneg %p50
        $region84: #{tpu_custom_call.1} parent=81 // pred_check_branch
          %394 = sbr.rel (%p392) target = $region86
        $region85: #{tpu_custom_call.1} parent=81 // pred_region
          _
        $region86: #{tpu_custom_call.1} parent=81 // pred_fallthru
          _
        // Predicated region
        $region87: #{tpu_custom_call.1} parent=81 // pred_check
          %p395 = pneg %p71
        $region88: #{tpu_custom_call.1} parent=81 // pred_check_branch
          %397 = sbr.rel (%p395) target = $region90
        $region89: #{tpu_custom_call.1} parent=81 // pred_region
          %398 = dma.done [#allocation4], 512
        $region90: #{tpu_custom_call.1} parent=81 // pred_fallthru
          _
        // Predicated region
        $region91: #{tpu_custom_call.1} parent=81 // pred_check
          %p399 = pneg %p113
        $region92: #{tpu_custom_call.1} parent=81 // pred_check_branch
          %401 = sbr.rel (%p399) target = $region94
        $region93: #{tpu_custom_call.1} parent=81 // pred_region
          %402 = dma.done [#allocation7], 512
        $region94: #{tpu_custom_call.1} parent=81 // pred_fallthru
          _
        %s403 = sand.u32 %s37, 1
        %s404 = sand.u32 %s37, 1
        %s405 = smul.addr %s404, 64
        %s406 = scalar_lea.vmem [#allocation2], %s405
        %p407 = pneg %p50
        %p408 = pneg %p47
        %p409 = pneg %p71
        %p410 = pneg %p68
        %p411 = pneg %p92
        %p412 = pneg %p89
        %p413 = pneg %p113
        %p414 = pneg %p110
        %p415 = pneg %p134
        %p416 = pneg %p131
        %p417 = pneg %p155
        %p418 = pneg %p152
        %p419 = pneg %p176
        %p420 = pneg %p173
        %p421 = pneg %p202
        %p422 = pneg %p199
        %s423 = sand.u32 %s189, 1
        %s424 = scalar_lea.sflag [#allocation5], %s423
        %s425 = sand.u32 %s189, 1
        %s426 = smul.addr %s425, 32
        %s427 = scalar_lea.vmem [#allocation8], %s426
        %p428 = pneg %p228
        %p429 = pneg %p225
        %s430 = sand.u32 %s29, 1
        %s431 = scalar_lea.sflag [#allocation10], %s430
        %s432 = sand.u32 %s215, 1
        %s433 = smul.addr %s432, 32
        %s434 = scalar_lea.vmem [#allocation9], %s433
        %p435 = pneg %p254
        %p436 = pneg %p251
        %s437 = sand.u32 %s29, 1
        %s438 = scalar_lea.sflag [#allocation10], %s437
        %s439 = sand.u32 %s241, 1
        %s440 = smul.addr %s439, 4
        %s441 = scalar_lea.vmem [#allocation11], %s440
        %v443 = vld [vmem:[%s391] sm:$0xff]
        %v444 = vld [vmem:[%s391 + $0x8] sm:$0xff]
        %v445 = vld [vmem:[%s391 + $0x10] sm:$0xff]
        %v446 = vld [vmem:[%s391 + $0x18] sm:$0xff]
        %v447 = vld [vmem:[%s391 + $0x20] sm:$0xff]
        %v448 = vld [vmem:[%s391 + $0x28] sm:$0xff]
        %v449 = vld [vmem:[%s391 + $0x30] sm:$0xff]
        %v450 = vld [vmem:[%s391 + $0x38] sm:$0xff]
        %v451 = vpack.c.bf16 %v444, %v443
        %v452 = vpack.c.bf16 %v446, %v445
        %v453 = vpack.c.bf16 %v448, %v447
        %v454 = vpack.c.bf16 %v450, %v449
        %v455 = vld [vmem:[#allocation3] sm:$0xf]
        %v456 = vld [vmem:[#allocation3 + $0x4] sm:$0xf]
        %v457 = vld [vmem:[#allocation3 + $0x8] sm:$0xf]
        %v458 = vld [vmem:[#allocation3 + $0xc] sm:$0xf]
        %v459 = vld [vmem:[#allocation3 + $0x10] sm:$0xf]
        %v460 = vld [vmem:[#allocation3 + $0x14] sm:$0xf]
        %v461 = vld [vmem:[#allocation3 + $0x18] sm:$0xf]
        %v462 = vld [vmem:[#allocation3 + $0x1c] sm:$0xf]
        %v463 = vld [vmem:[%s2] sm:$0xff]
        %v464 = vld [vmem:[%s2 + $0x8] sm:$0xff]
        %v465 = vld [vmem:[%s2 + $0x10] sm:$0xff]
        %v466 = vld [vmem:[%s2 + $0x18] sm:$0xff]
        %v467 = vld [vmem:[%s2 + $0x20] sm:$0xff]
        %v468 = vld [vmem:[%s2 + $0x28] sm:$0xff]
        %v469 = vld [vmem:[%s2 + $0x30] sm:$0xff]
        %v470 = vld [vmem:[%s2 + $0x38] sm:$0xff]
        %472 = vset.pattern.permute.xlu0 0
        %473 = vperm.xlu0 %472, %v463
        %v474 = vpop.permute.xlu0 %473
        %477 = vset.pattern.permute.xlu0 0
        %478 = vperm.xlu0 %477, %v464
        %v479 = vpop.permute.xlu0 %478
        %482 = vset.pattern.permute.xlu0 0
        %483 = vperm.xlu0 %482, %v465
        %v484 = vpop.permute.xlu0 %483
        %487 = vset.pattern.permute.xlu0 0
        %488 = vperm.xlu0 %487, %v466
        %v489 = vpop.permute.xlu0 %488
        %492 = vset.pattern.permute.xlu0 0
        %493 = vperm.xlu0 %492, %v467
        %v494 = vpop.permute.xlu0 %493
        %497 = vset.pattern.permute.xlu0 0
        %498 = vperm.xlu0 %497, %v468
        %v499 = vpop.permute.xlu0 %498
        %502 = vset.pattern.permute.xlu0 0
        %503 = vperm.xlu0 %502, %v469
        %v504 = vpop.permute.xlu0 %503
        %507 = vset.pattern.permute.xlu0 0
        %508 = vperm.xlu0 %507, %v470
        %v509 = vpop.permute.xlu0 %508
        %v519 = vunpack.c.l.b16 %v455
        %v520 = vunpack.c.l.b16 %v456
        %v521 = vunpack.c.l.b16 %v457
        %v522 = vunpack.c.l.b16 %v458
        %v523 = vunpack.c.l.b16 %v459
        %v524 = vunpack.c.l.b16 %v460
        %v525 = vunpack.c.l.b16 %v461
        %v526 = vunpack.c.l.b16 %v462
        %v527 = vpack.c.b16 %v520, %v519
        %v528 = vpack.c.b16 %v522, %v521
        %v529 = vpack.c.b16 %v524, %v523
        %v530 = vpack.c.b16 %v526, %v525
        %vm531 = vcmask 523264
        %v533 = vsel %vm531, %v527, 0
        %v536 = vsel %vm531, %v528, 0
        %v539 = vsel %vm531, %v529, 0
        %v542 = vsel %vm531, %v530, 0
        %544 = vmatprep.subr.bf16.mxu0 0
        %545 = vmatpush1.bf16.msra.mxu0 0
        %546 = vmatprep.subr.bf16.mxu0 0
        %547 = vmatpush1.bf16.msra.mxu0 0
        %548 = vmatprep.subr.bf16.mxu0 0
        %549 = vmatpush1.bf16.msra.mxu0 0
        %550 = vmatprep.subr.bf16.mxu0 0
        %551 = vmatpush1.bf16.msra.mxu0 0
        %552 = vmatprep.subr.bf16.mxu0 0
        %553 = vmatpush1.bf16.msra.mxu0 %v454
        %554 = vmatprep.subr.bf16.mxu0 0
        %555 = vmatpush1.bf16.msra.mxu0 %v453
        %556 = vmatprep.subr.bf16.mxu0 0
        %557 = vmatpush1.bf16.msra.mxu0 %v452
        %558 = vmatprep.subr.bf16.mxu0 0
        %559 = vmatpush1.bf16.msra.mxu0 %v451
        %560 = vmatprep.subr.bf16.mxu0 0
        %561 = vmatpush2.bf16.msra.mxu0 0
        %562 = vmatprep.subr.bf16.mxu0 0
        %563 = vmatpush2.bf16.msra.mxu0 0
        %564 = vmatprep.subr.bf16.mxu0 0
        %565 = vmatpush2.bf16.msra.mxu0 0
        %566 = vmatprep.subr.bf16.mxu0 0
        %567 = vmatpush2.bf16.msra.mxu0 0
        %568 = vmatprep.subr.bf16.mxu0 0
        %569 = vmatpush2.bf16.msra.mxu0 0
        %570 = vmatprep.subr.bf16.mxu0 0
        %571 = vmatpush2.bf16.msra.mxu0 0
        %572 = vmatprep.subr.bf16.mxu0 0
        %573 = vmatpush2.bf16.msra.mxu0 0
        %574 = vmatprep.subr.bf16.mxu0 0
        %575 = vmatpush2.bf16.msra.mxu0 0
        %576 = vmatprep.mubr.bf16.mxu0 0
        %577 = vmatmul.mubr.bf16.gmra.mxu0 %v533
        %v578 = vpop.f32.mrf.mxu0
        %v579 = vadd.f32 %v474, %v578
        %v580 = vpop.f32.mrf.mxu0
        %v581 = vpop.f32.mrf.mxu0
        %v582 = vadd.f32 %v479, %v581
        %v583 = vpop.f32.mrf.mxu0
        %584 = vmatprep.mubr.bf16.mxu0 0
        %585 = vmatmul.mubr.bf16.gmra.mxu0 %v536
        %v586 = vpop.f32.mrf.mxu0
        %v587 = vadd.f32 %v484, %v586
        %v588 = vpop.f32.mrf.mxu0
        %v589 = vpop.f32.mrf.mxu0
        %v590 = vadd.f32 %v489, %v589
        %v591 = vpop.f32.mrf.mxu0
        %592 = vmatprep.mubr.bf16.mxu0 0
        %593 = vmatmul.mubr.bf16.gmra.mxu0 %v539
        %v594 = vpop.f32.mrf.mxu0
        %v595 = vadd.f32 %v494, %v594
        %v596 = vpop.f32.mrf.mxu0
        %v597 = vpop.f32.mrf.mxu0
        %v598 = vadd.f32 %v499, %v597
        %v599 = vpop.f32.mrf.mxu0
        %600 = vmatprep.mubr.bf16.mxu0 0
        %601 = vmatmul.mubr.bf16.gmra.mxu0 %v542
        %v602 = vpop.f32.mrf.mxu0
        %v603 = vadd.f32 %v504, %v602
        %v604 = vpop.f32.mrf.mxu0
        %v605 = vpop.f32.mrf.mxu0
        %v606 = vadd.f32 %v509, %v605
        %v607 = vpop.f32.mrf.mxu0
        %608 = vdwg.mxu0
        %v609 = vmax.f32 %v579, 0.0
        %v610 = vmax.f32 %v582, 0.0
        %v611 = vmax.f32 %v587, 0.0
        %v612 = vmax.f32 %v590, 0.0
        %v613 = vmax.f32 %v595, 0.0
        %v614 = vmax.f32 %v598, 0.0
        %v615 = vmax.f32 %v603, 0.0
        %v616 = vmax.f32 %v606, 0.0
        %v617 = vpack.c.bf16 %v610, %v609
        %v618 = vpack.c.bf16 %v612, %v611
        %v619 = vpack.c.bf16 %v614, %v613
        %v620 = vpack.c.bf16 %v616, %v615
        %v621 = vld [vmem:[#allocation6] sm:$0xf]
        %v622 = vld [vmem:[#allocation6 + $0x4] sm:$0xf]
        %v623 = vld [vmem:[#allocation6 + $0x8] sm:$0xf]
        %v624 = vld [vmem:[#allocation6 + $0xc] sm:$0xf]
        %v625 = vld [vmem:[#allocation6 + $0x10] sm:$0xf]
        %v626 = vld [vmem:[#allocation6 + $0x14] sm:$0xf]
        %v627 = vld [vmem:[#allocation6 + $0x18] sm:$0xf]
        %v628 = vld [vmem:[#allocation6 + $0x1c] sm:$0xf]
        %v629 = vld [vmem:[%s4] sm:$0xff]
        %v630 = vld [vmem:[%s4 + $0x8] sm:$0xff]
        %v631 = vld [vmem:[%s4 + $0x10] sm:$0xff]
        %v632 = vld [vmem:[%s4 + $0x18] sm:$0xff]
        %v633 = vld [vmem:[%s4 + $0x20] sm:$0xff]
        %v634 = vld [vmem:[%s4 + $0x28] sm:$0xff]
        %v635 = vld [vmem:[%s4 + $0x30] sm:$0xff]
        %v636 = vld [vmem:[%s4 + $0x38] sm:$0xff]
        %638 = vset.pattern.permute.xlu0 0
        %639 = vperm.xlu0 %638, %v629
        %v640 = vpop.permute.xlu0 %639
        %643 = vset.pattern.permute.xlu0 0
        %644 = vperm.xlu0 %643, %v630
        %v645 = vpop.permute.xlu0 %644
        %648 = vset.pattern.permute.xlu0 0
        %649 = vperm.xlu0 %648, %v631
        %v650 = vpop.permute.xlu0 %649
        %653 = vset.pattern.permute.xlu0 0
        %654 = vperm.xlu0 %653, %v632
        %v655 = vpop.permute.xlu0 %654
        %658 = vset.pattern.permute.xlu0 0
        %659 = vperm.xlu0 %658, %v633
        %v660 = vpop.permute.xlu0 %659
        %663 = vset.pattern.permute.xlu0 0
        %664 = vperm.xlu0 %663, %v634
        %v665 = vpop.permute.xlu0 %664
        %668 = vset.pattern.permute.xlu0 0
        %669 = vperm.xlu0 %668, %v635
        %v670 = vpop.permute.xlu0 %669
        %673 = vset.pattern.permute.xlu0 0
        %674 = vperm.xlu0 %673, %v636
        %v675 = vpop.permute.xlu0 %674
        %v685 = vunpack.c.l.b16 %v621
        %v686 = vunpack.c.l.b16 %v622
        %v687 = vunpack.c.l.b16 %v623
        %v688 = vunpack.c.l.b16 %v624
        %v689 = vunpack.c.l.b16 %v625
        %v690 = vunpack.c.l.b16 %v626
        %v691 = vunpack.c.l.b16 %v627
        %v692 = vunpack.c.l.b16 %v628
        %v693 = vpack.c.b16 %v686, %v685
        %v694 = vpack.c.b16 %v688, %v687
        %v695 = vpack.c.b16 %v690, %v689
        %v696 = vpack.c.b16 %v692, %v691
        %v698 = vsel %vm531, %v693, 0
        %v701 = vsel %vm531, %v694, 0
        %v704 = vsel %vm531, %v695, 0
        %v707 = vsel %vm531, %v696, 0
        %709 = vmatprep.subr.bf16.mxu0 0
        %710 = vmatpush1.bf16.msra.mxu0 0
        %711 = vmatprep.subr.bf16.mxu0 0
        %712 = vmatpush1.bf16.msra.mxu0 0
        %713 = vmatprep.subr.bf16.mxu0 0
        %714 = vmatpush1.bf16.msra.mxu0 0
        %715 = vmatprep.subr.bf16.mxu0 0
        %716 = vmatpush1.bf16.msra.mxu0 0
        %717 = vmatprep.subr.bf16.mxu0 0
        %718 = vmatpush1.bf16.msra.mxu0 %v620
        %719 = vmatprep.subr.bf16.mxu0 0
        %720 = vmatpush1.bf16.msra.mxu0 %v619
        %721 = vmatprep.subr.bf16.mxu0 0
        %722 = vmatpush1.bf16.msra.mxu0 %v618
        %723 = vmatprep.subr.bf16.mxu0 0
        %724 = vmatpush1.bf16.msra.mxu0 %v617
        %725 = vmatprep.subr.bf16.mxu0 0
        %726 = vmatpush2.bf16.msra.mxu0 0
        %727 = vmatprep.subr.bf16.mxu0 0
        %728 = vmatpush2.bf16.msra.mxu0 0
        %729 = vmatprep.subr.bf16.mxu0 0
        %730 = vmatpush2.bf16.msra.mxu0 0
        %731 = vmatprep.subr.bf16.mxu0 0
        %732 = vmatpush2.bf16.msra.mxu0 0
        %733 = vmatprep.subr.bf16.mxu0 0
        %734 = vmatpush2.bf16.msra.mxu0 0
        %735 = vmatprep.subr.bf16.mxu0 0
        %736 = vmatpush2.bf16.msra.mxu0 0
        %737 = vmatprep.subr.bf16.mxu0 0
        %738 = vmatpush2.bf16.msra.mxu0 0
        %739 = vmatprep.subr.bf16.mxu0 0
        %740 = vmatpush2.bf16.msra.mxu0 0
        %741 = vmatprep.mubr.bf16.mxu0 0
        %742 = vmatmul.mubr.bf16.gmra.mxu0 %v698
        %v743 = vpop.f32.mrf.mxu0
        %v744 = vadd.f32 %v640, %v743
        %v745 = vpop.f32.mrf.mxu0
        %v746 = vpop.f32.mrf.mxu0
        %v747 = vadd.f32 %v645, %v746
        %v748 = vpop.f32.mrf.mxu0
        %749 = vmatprep.mubr.bf16.mxu0 0
        %750 = vmatmul.mubr.bf16.gmra.mxu0 %v701
        %v751 = vpop.f32.mrf.mxu0
        %v752 = vadd.f32 %v650, %v751
        %v753 = vpop.f32.mrf.mxu0
        %v754 = vpop.f32.mrf.mxu0
        %v755 = vadd.f32 %v655, %v754
        %v756 = vpop.f32.mrf.mxu0
        %757 = vmatprep.mubr.bf16.mxu0 0
        %758 = vmatmul.mubr.bf16.gmra.mxu0 %v704
        %v759 = vpop.f32.mrf.mxu0
        %v760 = vadd.f32 %v660, %v759
        %v761 = vpop.f32.mrf.mxu0
        %v762 = vpop.f32.mrf.mxu0
        %v763 = vadd.f32 %v665, %v762
        %v764 = vpop.f32.mrf.mxu0
        %765 = vmatprep.mubr.bf16.mxu0 0
        %766 = vmatmul.mubr.bf16.gmra.mxu0 %v707
        %v767 = vpop.f32.mrf.mxu0
        %v768 = vadd.f32 %v670, %v767
        %v769 = vpop.f32.mrf.mxu0
        %v770 = vpop.f32.mrf.mxu0
        %v771 = vadd.f32 %v675, %v770
        %v772 = vpop.f32.mrf.mxu0
        %773 = vdwg.mxu0
        %v774 = vmax.f32 %v744, 0.0
        %v775 = vmax.f32 %v747, 0.0
        %v776 = vmax.f32 %v752, 0.0
        %v777 = vmax.f32 %v755, 0.0
        %v778 = vmax.f32 %v760, 0.0
        %v779 = vmax.f32 %v763, 0.0
        %v780 = vmax.f32 %v768, 0.0
        %v781 = vmax.f32 %v771, 0.0
        %v782 = vld [vmem:[%s5] sm:$0xf]
        %v783 = vld [vmem:[%s6] sm:$0xff]
        %785 = vset.pattern.permute.xlu0 0
        %786 = vperm.xlu0 %785, %v783
        %v787 = vpop.permute.xlu0 %786
        %v790 = vsel %vm531, %v782, 0
        %792 = vmatprep.subr.bf16.mxu0 0
        %793 = vmatpush1.bf16.msra.mxu0 0
        %794 = vmatprep.subr.bf16.mxu0 0
        %795 = vmatpush1.bf16.msra.mxu0 0
        %796 = vmatprep.subr.bf16.mxu0 0
        %797 = vmatpush1.bf16.msra.mxu0 0
        %798 = vmatprep.subr.bf16.mxu0 0
        %799 = vmatpush1.bf16.msra.mxu0 0
        %800 = vmatprep.subr.bf16.mxu0 0
        %801 = vmatpush1.bf16.msra.mxu0 %v620
        %802 = vmatprep.subr.bf16.mxu0 0
        %803 = vmatpush1.bf16.msra.mxu0 %v619
        %804 = vmatprep.subr.bf16.mxu0 0
        %805 = vmatpush1.bf16.msra.mxu0 %v618
        %806 = vmatprep.subr.bf16.mxu0 0
        %807 = vmatpush1.bf16.msra.mxu0 %v617
        %808 = vmatprep.subr.bf16.mxu0 0
        %809 = vmatpush2.bf16.msra.mxu0 0
        %810 = vmatprep.subr.bf16.mxu0 0
        %811 = vmatpush2.bf16.msra.mxu0 0
        %812 = vmatprep.subr.bf16.mxu0 0
        %813 = vmatpush2.bf16.msra.mxu0 0
        %814 = vmatprep.subr.bf16.mxu0 0
        %815 = vmatpush2.bf16.msra.mxu0 0
        %816 = vmatprep.subr.bf16.mxu0 0
        %817 = vmatpush2.bf16.msra.mxu0 0
        %818 = vmatprep.subr.bf16.mxu0 0
        %819 = vmatpush2.bf16.msra.mxu0 0
        %820 = vmatprep.subr.bf16.mxu0 0
        %821 = vmatpush2.bf16.msra.mxu0 0
        %822 = vmatprep.subr.bf16.mxu0 0
        %823 = vmatpush2.bf16.msra.mxu0 0
        %824 = vmatprep.mubr.bf16.mxu0 0
        %825 = vmatmul.mubr.bf16.gmra.mxu0 %v790
        %v826 = vpop.f32.mrf.mxu0
        %v827 = vadd.f32 %v787, %v826
        %v828 = vpop.f32.mrf.mxu0
        %v829 = vpop.f32.mrf.mxu0
        %v830 = vpop.f32.mrf.mxu0
        %831 = vdwg.mxu0
        %v832 = vmax.f32 %v827, 0.0
        %v837 = vunpack.c.l.b16 %v617
        %v838 = vunpack.c.h.b16 %v617
        %v839 = vunpack.c.l.b16 %v618
        %v840 = vunpack.c.h.b16 %v618
        %v841 = vunpack.c.l.b16 %v619
        %v842 = vunpack.c.h.b16 %v619
        %v843 = vunpack.c.l.b16 %v620
        %v844 = vunpack.c.h.b16 %v620
        %v845 = vpack.c.b16 %v837, %v837
        %v846 = vpack.c.b16 %v838, %v838
        %v847 = vpack.c.b16 %v839, %v839
        %v848 = vpack.c.b16 %v840, %v840
        %v849 = vpack.c.b16 %v841, %v841
        %v850 = vpack.c.b16 %v842, %v842
        %v851 = vpack.c.b16 %v843, %v843
        %v852 = vpack.c.b16 %v844, %v844
        %861 = vst [vmem:[%s427] sm:$0xf] %v845
        %862 = vst [vmem:[%s427 + $0x4] sm:$0xf] %v846
        %863 = vst [vmem:[%s427 + $0x8] sm:$0xf] %v847
        %864 = vst [vmem:[%s427 + $0xc] sm:$0xf] %v848
        %865 = vst [vmem:[%s427 + $0x10] sm:$0xf] %v849
        %866 = vst [vmem:[%s427 + $0x14] sm:$0xf] %v850
        %867 = vst [vmem:[%s427 + $0x18] sm:$0xf] %v851
        %868 = vst [vmem:[%s427 + $0x1c] sm:$0xf] %v852
        %v869 = vpack.c.bf16 %v775, %v774
        %v870 = vpack.c.bf16 %v777, %v776
        %v871 = vpack.c.bf16 %v779, %v778
        %v872 = vpack.c.bf16 %v781, %v780
        %v877 = vunpack.c.l.b16 %v869
        %v878 = vunpack.c.h.b16 %v869
        %v879 = vunpack.c.l.b16 %v870
        %v880 = vunpack.c.h.b16 %v870
        %v881 = vunpack.c.l.b16 %v871
        %v882 = vunpack.c.h.b16 %v871
        %v883 = vunpack.c.l.b16 %v872
        %v884 = vunpack.c.h.b16 %v872
        %v885 = vpack.c.b16 %v877, %v877
        %v886 = vpack.c.b16 %v878, %v878
        %v887 = vpack.c.b16 %v879, %v879
        %v888 = vpack.c.b16 %v880, %v880
        %v889 = vpack.c.b16 %v881, %v881
        %v890 = vpack.c.b16 %v882, %v882
        %v891 = vpack.c.b16 %v883, %v883
        %v892 = vpack.c.b16 %v884, %v884
        %901 = vst [vmem:[%s434] sm:$0xf] %v885
        %902 = vst [vmem:[%s434 + $0x4] sm:$0xf] %v886
        %903 = vst [vmem:[%s434 + $0x8] sm:$0xf] %v887
        %904 = vst [vmem:[%s434 + $0xc] sm:$0xf] %v888
        %905 = vst [vmem:[%s434 + $0x10] sm:$0xf] %v889
        %906 = vst [vmem:[%s434 + $0x14] sm:$0xf] %v890
        %907 = vst [vmem:[%s434 + $0x18] sm:$0xf] %v891
        %908 = vst [vmem:[%s434 + $0x1c] sm:$0xf] %v892
        %v909 = vpack.c.bf16 %v832, %v832
        %910 = vst [vmem:[%s441] sm:$0xf] %v909
        %s911 = sand.u32 %s189, 1
        %s912 = scalar_lea.sflag [#allocation5], %s911
        %s913 = sand.u32 %s189, 1
        %s914 = smul.addr %s913, 32
        %s915 = scalar_lea.vmem [#allocation8], %s914
        %s916 = sand.u32 %s29, 1
        %s917 = scalar_lea.sflag [#allocation10], %s916
        %s918 = sand.u32 %s215, 1
        %s919 = smul.addr %s918, 32
        %s920 = scalar_lea.vmem [#allocation9], %s919
        %s921 = sand.u32 %s29, 1
        %s922 = scalar_lea.sflag [#allocation10], %s921
        %s923 = sand.u32 %s241, 1
        %s924 = smul.addr %s923, 4
        %s925 = scalar_lea.vmem [#allocation11], %s924
        // Predicated region
        $region95: #{tpu_custom_call.1} parent=81 // pred_check
          %p926 = pneg %p199
        $region96: #{tpu_custom_call.1} parent=81 // pred_check_branch
          %928 = sbr.rel (%p926) target = $region98
        $region97: #{tpu_custom_call.1} parent=81 // pred_region
          %s930 = ssub.s32 512, 512
          %931 = vsyncadd %s912, %s930
          %s932 = smul.addr %s29, 64
          %s933 = scalar_lea.hbm %s7, %s932
          %s934 = sshll.u32 %s915, 4
          %s935 = int_to_ptr.vmem [resolvable:$true] %s934
          %940 = dma.vmem_to_hbm [thread:$0]  %s935, 512, %s933, %s912, 64, 128, 4
        $region98: #{tpu_custom_call.1} parent=81 // pred_fallthru
          _
        // Predicated region
        $region99: #{tpu_custom_call.1} parent=81 // pred_check
          %p941 = pneg %p225
        $region100: #{tpu_custom_call.1} parent=81 // pred_check_branch
          %943 = sbr.rel (%p941) target = $region102
        $region101: #{tpu_custom_call.1} parent=81 // pred_region
          %s945 = ssub.s32 512, 512
          %946 = vsyncadd %s917, %s945
          %s947 = smul.addr %s29, 64
          %s948 = scalar_lea.hbm %s8, %s947
          %s949 = sshll.u32 %s920, 4
          %s950 = int_to_ptr.vmem [resolvable:$true] %s949
          %955 = dma.vmem_to_hbm [thread:$0]  %s950, 512, %s948, %s917, 64, 128, 4
        $region102: #{tpu_custom_call.1} parent=81 // pred_fallthru
          _
        // Predicated region
        $region103: #{tpu_custom_call.1} parent=81 // pred_check
          %p956 = pneg %p251
        $region104: #{tpu_custom_call.1} parent=81 // pred_check_branch
          %958 = sbr.rel (%p956) target = $region106
        $region105: #{tpu_custom_call.1} parent=81 // pred_region
          %s960 = ssub.s32 64, 64
          %961 = vsyncadd %s922, %s960
          %s962 = smul.addr %s29, 64
          %s963 = scalar_lea.hbm %s9, %s962
          %s965 = sshll.u32 %s925, 4
          %s966 = int_to_ptr.vmem [resolvable:$true] %s965
          %968 = dma.vmem_to_hbm [thread:$0]  %s966, 64, %s963, %s922
        $region106: #{tpu_custom_call.1} parent=81 // pred_fallthru
          _
      $region82: #{tpu_custom_call.1} parent=5 // pred_fallthru
        _
      %p969 = scmp.le.s32.totalorder 2, %s24
      // Predicated region
      $region107: #{tpu_custom_call.1} parent=5 // pred_check
        %p970 = pneg %p969
      $region108: #{tpu_custom_call.1} parent=5 // pred_check_branch
        %972 = sbr.rel (%p970) target = $region110
      $region109: #{tpu_custom_call.1} parent=5 // pred_region
        %s973 = ssub.s32 %s24, 2
        // Predicated region
        $region111: #{tpu_custom_call.1} parent=109 // pred_check
          %p974 = pneg %p205
        $region112: #{tpu_custom_call.1} parent=109 // pred_check_branch
          %976 = sbr.rel (%p974) target = $region114
        $region113: #{tpu_custom_call.1} parent=109 // pred_region
          %s977 = sand.u32 %s190, 1
          %s978 = scalar_lea.sflag [#allocation5], %s977
          %s979 = sand.u32 %s190, 1
          %s980 = smul.addr %s979, 32
          %s981 = scalar_lea.vmem [#allocation8], %s980
          %982 = dma.done %s978, 512
        $region114: #{tpu_custom_call.1} parent=109 // pred_fallthru
          _
        // Predicated region
        $region115: #{tpu_custom_call.1} parent=109 // pred_check
          %p983 = pneg %p231
        $region116: #{tpu_custom_call.1} parent=109 // pred_check_branch
          %985 = sbr.rel (%p983) target = $region118
        $region117: #{tpu_custom_call.1} parent=109 // pred_region
          %s986 = sand.u32 %s30, 1
          %s987 = scalar_lea.sflag [#allocation10], %s986
          %s988 = sand.u32 %s216, 1
          %s989 = smul.addr %s988, 32
          %s990 = scalar_lea.vmem [#allocation9], %s989
          %991 = dma.done %s987, 512
        $region118: #{tpu_custom_call.1} parent=109 // pred_fallthru
          _
        // Predicated region
        $region119: #{tpu_custom_call.1} parent=109 // pred_check
          %p992 = pneg %p257
        $region120: #{tpu_custom_call.1} parent=109 // pred_check_branch
          %994 = sbr.rel (%p992) target = $region122
        $region121: #{tpu_custom_call.1} parent=109 // pred_region
          %s995 = sand.u32 %s30, 1
          %s996 = scalar_lea.sflag [#allocation10], %s995
          %s997 = sand.u32 %s242, 1
          %s998 = smul.addr %s997, 4
          %s999 = scalar_lea.vmem [#allocation11], %s998
          %1000 = dma.done %s996, 64
        $region122: #{tpu_custom_call.1} parent=109 // pred_fallthru
          _
      $region110: #{tpu_custom_call.1} parent=5 // pred_fallthru
        _
    $region6: #{tpu_custom_call.1} parent=1 // loop_footer
      %s28 = sadd.s32 1, %s24
    $region7: #{tpu_custom_call.1} parent=1 // loop_footer_branch
      %23 = sbr.rel target = $region3
    $region8: #{tpu_custom_call.1} parent=1 // loop_exit
      _
    %1001 = vsyncpa [#allocation4], 1
    %s1002 = scalar_lea.sflag [#allocation4], 1
    %1003 = vsyncpa %s1002, 1
    %1004 = vsyncpa [#allocation7], 1
    %1005 = vsyncpa [#allocation5], 1
    %s1006 = scalar_lea.sflag [#allocation5], 1
    %1007 = vsyncpa %s1006, 1
    %1008 = vsyncpa [#allocation10], 1
    %s1009 = scalar_lea.sflag [#allocation10], 1
    %1010 = vsyncpa %s1009, 1

</llo_original>
